<compile_context>
chip_gen: v6e
topology: v6e:2x2x1
jax: 0.10.0
libtpu: 0.0.40
codegen_flags: <defaults>
</compile_context>

<pallas_src>
import jax
import jax.numpy as jnp
from jax.experimental import pallas as pl
from jax.experimental.pallas import tpu as pltpu

LANES = 128     # lane width (last dim of a vreg)
SUBLANES = 8    # sublane count (second-to-last dim of a vreg)


def _device_config():
    """Return (ncores, max_block_rows) for the local TPU generation (conservative default)."""
    kind = ""
    try:
        kind = jax.devices()[0].device_kind.lower()
    except Exception:
        pass
    if "v7" in kind or "7x" in kind:
        # 2 TensorCores/chip; (8192,128) f32 block = 4 MiB; 2 inputs x 2 bufs = 16 MiB < 32 MiB scoped.
        return 2, 8192
    if "v6" in kind:
        # 1 TC; 16 MiB double-buffered fits the 32 MiB default scoped VMEM.
        return 1, 8192
    # v5e / v5p / v4 / unknown: smallest default scoped VMEM (16 MiB) -> 8 MiB double-buffered.
    return 1, 4096


def _make_bce_partial_kernel(tr, blocks_per_core, full_blocks, n_valid):
    """Per-core partial sums of the numerically-stable BCE-with-logits loss."""
    vregs = tr // SUBLANES

    def kernel(x_ref, y_ref, out_ref):
        c = pl.program_id(0)            # core slice (parallel / core-parallel)
        i = pl.program_id(1)            # streaming step within the slice (arbitrary)

        @pl.when(i == 0)
        def _():
            out_ref[...] = jnp.zeros_like(out_ref)

        x = x_ref[...].astype(jnp.float32)
        y = y_ref[...].astype(jnp.float32)
        # Numerically stable: max(x,0) - x*y + log1p(exp(-|x|))  (matches PyTorch's form).
        loss = jnp.maximum(x, 0.0) - x * y + jnp.log1p(jnp.exp(-jnp.abs(x)))

        block_id = c * blocks_per_core + i

        @pl.when(block_id < full_blocks)
        def _():
            # Hot path: vreg-shaped accumulate -> pure VALU adds, no cross-lane reduce.
            out_ref[...] += loss.reshape(vregs, SUBLANES, LANES).sum(axis=0)[None]

        @pl.when(block_id >= full_blocks)
        def _():
            # Cold path: blocks overlapping (or entirely beyond) the ragged tail. Mask out
            # padded elements and partial-block out-of-bounds garbage before accumulating.
            # TODO(synk): flat-index math is int32; for element counts approaching 2**31 use
            # per-block valid counts instead.
            row_ids = jax.lax.broadcasted_iota(jnp.int32, (tr, LANES), 0)
            col_ids = jax.lax.broadcasted_iota(jnp.int32, (tr, LANES), 1)
            flat_idx = (block_id * tr + row_ids) * LANES + col_ids
            masked = jnp.where(flat_idx < n_valid, loss, 0.0)
            out_ref[...] += masked.reshape(vregs, SUBLANES, LANES).sum(axis=0)[None]

    return kernel


def bce_with_logits_loss(y_pred, y_true, reduction="mean", max_block_rows=None):
    """JAX/Pallas equivalent of torch.nn.BCEWithLogitsLoss (module defaults: mean reduction).

    # TODO(synk): optional `weight` / `pos_weight` scaling and reduction='none' are not
    # implemented (the wrapped module uses the defaults: None / None / 'mean').
    """
    assert y_pred.shape == y_true.shape
    if reduction not in ("mean", "sum"):
        raise NotImplementedError("Only 'mean' and 'sum' reductions are supported.")

    n = int(y_pred.size)
    x = jnp.ravel(y_pred)
    y = jnp.ravel(y_true)

    # Tiny-input fast path: fixed pallas_call/pipeline overhead dominates below ~1 vreg row-group.
    if n < SUBLANES * LANES:
        xf = x.astype(jnp.float32)
        yf = y.astype(jnp.float32)
        loss = jnp.maximum(xf, 0.0) - xf * yf + jnp.log1p(jnp.exp(-jnp.abs(xf)))
        total = jnp.sum(loss)
        return total / jnp.float32(n) if reduction == "mean" else total

    ncores, tr_cap = _device_config()
    if max_block_rows is not None:
        assert max_block_rows % SUBLANES == 0
        tr_cap = max_block_rows

    # Lane-dense layout: pad ONLY when n is not lane-aligned (common case n % 128 == 0 -> no
    # extra HBM traffic); when padding is needed, pad to the next vreg (1024-element) boundary.
    if n % LANES != 0:
        padded_n = pl.cdiv(n, SUBLANES * LANES) * (SUBLANES * LANES)
        x = jnp.pad(x, (0, padded_n - n))
        y = jnp.pad(y, (0, padded_n - n))
    else:
        padded_n = n
    rows = padded_n // LANES
    x2 = x.reshape(rows, LANES)
    y2 = y.reshape(rows, LANES)

    tr = min(tr_cap, pl.cdiv(rows, SUBLANES) * SUBLANES)   # block rows (multiple of 8)
    blocks = pl.cdiv(rows, tr)          # last block may overrun `rows`; masked in-kernel
    bpc = pl.cdiv(blocks, ncores)       # blocks per core
    full_blocks = n // (tr * LANES)     # blocks containing only valid elements (hot path)

    kernel = _make_bce_partial_kernel(tr, bpc, full_blocks, n)

    def in_map(c, i):
        # Clamp so padding-only grid steps (block_id >= blocks) re-point at the last real
        # block (already resident, no new DMA target); their contribution is fully masked.
        return (jnp.minimum(c * bpc + i, blocks - 1), 0)

    in_spec = pl.BlockSpec((tr, LANES), in_map)
    out_spec = pl.BlockSpec((1, SUBLANES, LANES), lambda c, i: (c, 0, 0))

    if ncores > 1:
        semantics_candidates = [
            (pltpu.CORE_PARALLEL, pltpu.ARBITRARY),   # actually shard across v7x's 2 TCs
            (pltpu.PARALLEL, pltpu.ARBITRARY),        # safe fallback if rejected
        ]
    else:
        semantics_candidates = [(pltpu.PARALLEL, pltpu.ARBITRARY)]

    partial = None
    last_err = None
    for semantics in semantics_candidates:
        try:
            partial = pl.pallas_call(
                kernel,
                out_shape=jax.ShapeDtypeStruct((ncores, SUBLANES, LANES), jnp.float32),
                grid_spec=pltpu.PrefetchScalarGridSpec(
                    num_scalar_prefetch=0,
                    grid=(ncores, bpc),
                    in_specs=[in_spec, in_spec],
                    out_specs=out_spec,
                ),
                compiler_params=pltpu.CompilerParams(dimension_semantics=semantics),
            )(x2, y2)
            break
        except Exception as e:   # only hit on an unexpected lowering rejection of CORE_PARALLEL
            last_err = e
            partial = None
    if partial is None:
        raise last_err

    total = jnp.sum(partial)     # tiny (ncores, 8, 128) final reduce in the wrapper
    if reduction == "mean":
        return total / jnp.float32(n)
    return total


def _reference(y_pred, y_true, reduction="mean"):
    x = y_pred.astype(jnp.float32)
    y = y_true.astype(jnp.float32)
    loss = jnp.maximum(x, 0.0) - x * y + jnp.log1p(jnp.exp(-jnp.abs(x)))
    return jnp.mean(loss) if reduction == "mean" else jnp.sum(loss)


if __name__ == "__main__":
    key = jax.random.PRNGKey(0)
    k1, k2, k3, k4, k5, k6 = jax.random.split(key, 6)

    # 1) Module-shaped NCHW input, lane-aligned (n % 128 == 0), default block size.
    shape1 = (2, 4, 16, 16)
    yp1 = jax.random.normal(k1, shape1, dtype=jnp.float32)
    yt1 = jax.random.bernoulli(k2, 0.5, shape1).astype(jnp.float32)
    out1 = jax.block_until_ready(bce_with_logits_loss(yp1, yt1, reduction="mean"))
    ref1 = jax.block_until_ready(_reference(yp1, yt1, "mean"))
    assert jnp.allclose(out1, ref1, rtol=1e-5, atol=1e-6), (out1, ref1)

    # 2) Multi-block streaming + partial (overrunning) final block, forced via small blocks.
    shape2 = (3, 7, 128)   # 2688 elements -> 21 rows of 128; tr=8 -> 3 blocks, last masked
    yp2 = jax.random.normal(k3, shape2, dtype=jnp.float32)
    yt2 = jax.random.bernoulli(k4, 0.5, shape2).astype(jnp.float32)
    out2 = jax.block_until_ready(bce_with_logits_loss(yp2, yt2, reduction="mean", max_block_rows=8))
    ref2 = jax.block_until_ready(_reference(yp2, yt2, "mean"))
    assert jnp.allclose(out2, ref2, rtol=1e-5, atol=1e-6), (out2, ref2)

    # 3) Ragged element count (n % 128 != 0) + 'sum' reduction.
    shape3 = (3, 5, 9, 9)  # 1215 elements -> lane pad + mask path
    yp3 = jax.random.normal(k5, shape3, dtype=jnp.float32)
    yt3 = jax.random.bernoulli(k6, 0.5, shape3).astype(jnp.float32)
    out3 = jax.block_until_ready(bce_with_logits_loss(yp3, yt3, reduction="sum"))
    ref3 = jax.block_until_ready(_reference(yp3, yt3, "sum"))
    assert jnp.allclose(out3, ref3, rtol=1e-5, atol=1e-4), (out3, ref3)

    print("KERNEL_OK")
</pallas_src>

<mosaic_0001>
module attributes {stable_mosaic.version = 11 : i64} {
  func.func @kernel(%arg0: i32, %arg1: i32, %arg2: memref<16x128xf32, #tpu.memory_space<vmem>>, %arg3: memref<16x128xf32, #tpu.memory_space<vmem>>, %arg4: memref<1x8x128xf32, #tpu.memory_space<vmem>>) attributes {dimension_semantics = [#tpu.dimension_semantics<parallel>, #tpu.dimension_semantics<arbitrary>], iteration_bounds = array<i64: 1, 1>, scalar_prefetch = 0 : i64, scratch_operands = 0 : i64, tpu.core_type = #tpu.core_type<tc>, window_params = [{transform_indices = @transform_0, window_bounds = array<i64: 16, 128>}, {transform_indices = @transform_1, window_bounds = array<i64: 16, 128>}, {transform_indices = @transform_2, window_bounds = array<i64: 1, 8, 128>}]} {
    %c0_i32 = arith.constant 0 : i32
    %0 = arith.cmpi eq, %arg1, %c0_i32 : i32
    %1 = arith.extui %0 : i1 to i32
    %c0_i32_0 = arith.constant 0 : i32
    %2 = arith.cmpi ne, %1, %c0_i32_0 : i32
    scf.if %2 {
      %cst_9 = arith.constant 0.000000e+00 : f32
      %23 = vector.broadcast %cst_9 : f32 to vector<1x8x128xf32>
      %c0_10 = arith.constant 0 : index
      %c0_11 = arith.constant 0 : index
      %c0_12 = arith.constant 0 : index
      %24 = vector.load %arg4[%c0_10, %c0_11, %c0_12] : memref<1x8x128xf32, #tpu.memory_space<vmem>>, vector<1x8x128xf32>
      tpu.vector_store %arg4[%c0_10, %c0_11, %c0_12], %23 {strides = array<i32>} : memref<1x8x128xf32, #tpu.memory_space<vmem>>, vector<1x8x128xf32>,
    } else {
    }
    %c0 = arith.constant 0 : index
    %c0_1 = arith.constant 0 : index
    %3 = vector.load %arg2[%c0, %c0_1] : memref<16x128xf32, #tpu.memory_space<vmem>>, vector<16x128xf32>
    %c0_2 = arith.constant 0 : index
    %c0_3 = arith.constant 0 : index
    %4 = vector.load %arg3[%c0_2, %c0_3] : memref<16x128xf32, #tpu.memory_space<vmem>>, vector<16x128xf32>
    %cst = arith.constant 0.000000e+00 : f32
    %5 = vector.broadcast %cst : f32 to vector<16x128xf32>
    %6 = arith.maximumf %3, %5 : vector<16x128xf32>
    %7 = arith.mulf %3, %4 : vector<16x128xf32>
    %8 = arith.subf %6, %7 : vector<16x128xf32>
    %9 = math.absf %3 : vector<16x128xf32>
    %cst_4 = arith.constant 0.000000e+00 : f32
    %10 = vector.broadcast %cst_4 : f32 to vector<16x128xf32>
    %11 = arith.subf %10, %9 : vector<16x128xf32>
    %12 = math.exp %11 : vector<16x128xf32>
    %13 = math.log1p %12 : vector<16x128xf32>
    %14 = arith.addf %8, %13 : vector<16x128xf32>
    %c1_i32 = arith.constant 1 : i32
    %15 = arith.muli %arg0, %c1_i32 : i32
    %16 = arith.addi %15, %arg1 : i32
    %c1_i32_5 = arith.constant 1 : i32
    %17 = arith.cmpi slt, %16, %c1_i32_5 : i32
    %18 = arith.extui %17 : i1 to i32
    %c0_i32_6 = arith.constant 0 : i32
    %19 = arith.cmpi ne, %18, %c0_i32_6 : i32
    scf.if %19 {
      %c0_9 = arith.constant 0 : index
      %c0_10 = arith.constant 0 : index
      %c0_11 = arith.constant 0 : index
      %23 = vector.load %arg4[%c0_9, %c0_10, %c0_11] : memref<1x8x128xf32, #tpu.memory_space<vmem>>, vector<1x8x128xf32>
      %24 = vector.shape_cast %14 : vector<16x128xf32> to vector<2x8x128xf32>
      %cst_12 = arith.constant dense<0.000000e+00> : vector<8x128xf32>
      %25 = vector.multi_reduction <add>, %24, %cst_12 [0] : vector<2x8x128xf32> to vector<8x128xf32>
      %26 = vector.shape_cast %25 : vector<8x128xf32> to vector<1x8x128xf32>
      %27 = arith.addf %23, %26 : vector<1x8x128xf32>
      %c0_13 = arith.constant 0 : index
      %c0_14 = arith.constant 0 : index
      %c0_15 = arith.constant 0 : index
      %28 = vector.load %arg4[%c0_13, %c0_14, %c0_15] : memref<1x8x128xf32, #tpu.memory_space<vmem>>, vector<1x8x128xf32>
      tpu.vector_store %arg4[%c0_13, %c0_14, %c0_15], %27 {strides = array<i32>} : memref<1x8x128xf32, #tpu.memory_space<vmem>>, vector<1x8x128xf32>,
    } else {
    }
    %c1_i32_7 = arith.constant 1 : i32
    %20 = arith.cmpi sge, %16, %c1_i32_7 : i32
    %21 = arith.extui %20 : i1 to i32
    %c0_i32_8 = arith.constant 0 : i32
    %22 = arith.cmpi ne, %21, %c0_i32_8 : i32
    scf.if %22 {
      %23 = tpu.iota {dimensions = array<i32: 0>} : vector<16x128xi32>
      %24 = tpu.iota {dimensions = array<i32: 1>} : vector<16x128xi32>
      %c16_i32 = arith.constant 16 : i32
      %25 = arith.muli %16, %c16_i32 : i32
      %26 = vector.broadcast %25 : i32 to vector<16x128xi32>
      %27 = arith.addi %26, %23 : vector<16x128xi32>
      %c128_i32 = arith.constant 128 : i32
      %28 = vector.broadcast %c128_i32 : i32 to vector<16x128xi32>
      %29 = arith.muli %27, %28 : vector<16x128xi32>
      %30 = arith.addi %29, %24 : vector<16x128xi32>
      %c2048_i32 = arith.constant 2048 : i32
      %31 = vector.broadcast %c2048_i32 : i32 to vector<16x128xi32>
      %32 = arith.cmpi slt, %30, %31 : vector<16x128xi32>
      %cst_9 = arith.constant 0.000000e+00 : f32
      %33 = vector.broadcast %cst_9 : f32 to vector<16x128xf32>
      %34 = arith.select %32, %14, %33 : vector<16x128xi1>, vector<16x128xf32>
      %c0_10 = arith.constant 0 : index
      %c0_11 = arith.constant 0 : index
      %c0_12 = arith.constant 0 : index
      %35 = vector.load %arg4[%c0_10, %c0_11, %c0_12] : memref<1x8x128xf32, #tpu.memory_space<vmem>>, vector<1x8x128xf32>
      %36 = vector.shape_cast %34 : vector<16x128xf32> to vector<2x8x128xf32>
      %cst_13 = arith.constant dense<0.000000e+00> : vector<8x128xf32>
      %37 = vector.multi_reduction <add>, %36, %cst_13 [0] : vector<2x8x128xf32> to vector<8x128xf32>
      %38 = vector.shape_cast %37 : vector<8x128xf32> to vector<1x8x128xf32>
      %39 = arith.addf %35, %38 : vector<1x8x128xf32>
      %c0_14 = arith.constant 0 : index
      %c0_15 = arith.constant 0 : index
      %c0_16 = arith.constant 0 : index
      %40 = vector.load %arg4[%c0_14, %c0_15, %c0_16] : memref<1x8x128xf32, #tpu.memory_space<vmem>>, vector<1x8x128xf32>
      tpu.vector_store %arg4[%c0_14, %c0_15, %c0_16], %39 {strides = array<i32>} : memref<1x8x128xf32, #tpu.memory_space<vmem>>, vector<1x8x128xf32>,
    } else {
    }
    return
  }
  func.func @transform_0(%arg0: i32, %arg1: i32) -> (i32, i32) {
    %c1_i32 = arith.constant 1 : i32
    %0 = arith.muli %arg0, %c1_i32 : i32
    %1 = arith.addi %0, %arg1 : i32
    %c0_i32 = arith.constant 0 : i32
    %2 = arith.minsi %1, %c0_i32 : i32
    %c0_i32_0 = arith.constant 0 : i32
    %c0_i32_1 = arith.constant 0 : i32
    return %2, %c0_i32_0 : i32, i32
  }
  func.func @transform_1(%arg0: i32, %arg1: i32) -> (i32, i32) {
    %c1_i32 = arith.constant 1 : i32
    %0 = arith.muli %arg0, %c1_i32 : i32
    %1 = arith.addi %0, %arg1 : i32
    %c0_i32 = arith.constant 0 : i32
    %2 = arith.minsi %1, %c0_i32 : i32
    %c0_i32_0 = arith.constant 0 : i32
    %c0_i32_1 = arith.constant 0 : i32
    return %2, %c0_i32_0 : i32, i32
  }
  func.func @transform_2(%arg0: i32, %arg1: i32) -> (i32, i32, i32) {
    %c0_i32 = arith.constant 0 : i32
    %c0_i32_0 = arith.constant 0 : i32
    %c0_i32_1 = arith.constant 0 : i32
    return %arg0, %c0_i32, %c0_i32_0 : i32, i32, i32
  }
}

</mosaic_0001>

<llo_original>
// kernel: tpu_custom_call.1
$region0: #{tpu_custom_call.1}
  #allocation0 [shape = 'u32[]', space=smem, size = 0x4, offset = 0x4, fixed_abs, tag = 'smem constant byte address 0x4 - core index']
  #allocation1 [shape = 'u32[144,128]{1,0:T(1,128)}', space=vmem, size = 0x12000, scoped, tag = 'internal scratch']
  %s0 = inlined_call_operand.hbm [shape: f32[16,128], index: 0, kind: input, shape index: {}]
  %s1 = inlined_call_operand.hbm [shape: f32[16,128], index: 1, kind: input, shape index: {}]
  %s2 = inlined_call_operand.hbm [shape: f32[1,8,128], index: 2, kind: output, shape index: {}]
  %s3 = sld [smem:[#allocation0]]
  $region38: #{tpu_custom_call.1} parent=0
    _
  %s5 = ssub.s32 1, %s3
  %s6 = scalar_select 0, %s5, %s3
  $region1: #{tpu_custom_call.1} parent=0
    #allocation2 [shape = 'u8[8192]{0}', space=vmem, size = 0x2000, scoped, tag = 'input window, operand 0, single buffered']
    #allocation3 [shape = 's32[1]{0}', space=sflag, size = 0x4, scoped, tag = 'scoped memory for tpu_custom_call.1']
    #allocation4 [shape = 's32[1]{0}', space=sflag, size = 0x4, scoped, tag = 'scoped memory for tpu_custom_call.1']
    #allocation5 [shape = 'u8[8192]{0}', space=vmem, size = 0x2000, scoped, tag = 'input window, operand 1, single buffered']
    #allocation6 [shape = 's32[1]{0}', space=sflag, size = 0x4, scoped, tag = 'scoped memory for tpu_custom_call.1']
    #allocation7 [shape = 'u8[4096]{0}', space=vmem, size = 0x1000, scoped, tag = 'output window, operand 0, single buffered']
    %7 = vsyncpa [#allocation3], 0
    %8 = vsyncpa [#allocation6], 0
    %9 = vsyncpa [#allocation4], 0
    // Predicated region
    $region2: #{tpu_custom_call.1} parent=1 // pred_check
      _
    $region3: #{tpu_custom_call.1} parent=1 // pred_check_branch
      %11 = sbr.rel (0) target = $region5
    $region4: #{tpu_custom_call.1} parent=1 // pred_region
      %s12 = sadd.s32 0, 0
      %p13 = scmp.lt.s32.totalorder %s12, 0
      %s14 = scalar_select %p13, %s12, 0
      %s15 = smul.u32 2, %s14
      %s17 = ssub.s32 256, 256
      %18 = vsyncadd [#allocation3], %s17
      %s19 = smul.addr %s15, 128
      %s20 = scalar_lea.hbm %s0, %s19
      %s21 = sshll.u32 [#allocation2], 4
      %s22 = int_to_ptr.vmem [resolvable:$true] %s21
      %27 = dma.hbm_to_vmem [thread:$0]  %s20, 256, %s22, [#allocation3], 128, 128, 8
    $region5: #{tpu_custom_call.1} parent=1 // pred_fallthru
      _
    // Predicated region
    $region6: #{tpu_custom_call.1} parent=1 // pred_check
      _
    $region7: #{tpu_custom_call.1} parent=1 // pred_check_branch
      %29 = sbr.rel (0) target = $region9
    $region8: #{tpu_custom_call.1} parent=1 // pred_region
      %s30 = sadd.s32 0, 0
      %p31 = scmp.lt.s32.totalorder %s30, 0
      %s32 = scalar_select %p31, %s30, 0
      %s33 = smul.u32 2, %s32
      %s35 = ssub.s32 256, 256
      %36 = vsyncadd [#allocation6], %s35
      %s37 = smul.addr %s33, 128
      %s38 = scalar_lea.hbm %s1, %s37
      %s39 = sshll.u32 [#allocation5], 4
      %s40 = int_to_ptr.vmem [resolvable:$true] %s39
      %45 = dma.hbm_to_vmem [thread:$0]  %s38, 256, %s40, [#allocation6], 128, 128, 8
    $region9: #{tpu_custom_call.1} parent=1 // pred_fallthru
      _
    // Predicated region
    $region10: #{tpu_custom_call.1} parent=1 // pred_check
      _
    $region11: #{tpu_custom_call.1} parent=1 // pred_check_branch
      %47 = sbr.rel (0) target = $region13
    $region12: #{tpu_custom_call.1} parent=1 // pred_region
      %48 = dma.done [#allocation3], 256
    $region13: #{tpu_custom_call.1} parent=1 // pred_fallthru
      _
    // Predicated region
    $region14: #{tpu_custom_call.1} parent=1 // pred_check
      _
    $region15: #{tpu_custom_call.1} parent=1 // pred_check_branch
      %50 = sbr.rel (0) target = $region17
    $region16: #{tpu_custom_call.1} parent=1 // pred_region
      %51 = dma.done [#allocation6], 256
    $region17: #{tpu_custom_call.1} parent=1 // pred_fallthru
      _
    %s52 = sadd.s32 0, 0
    %p53 = scmp.lt.s32.totalorder %s52, 0
    %s54 = scalar_select %p53, %s52, 0
    %s55 = smul.u32 2, %s54
    %s56 = sadd.s32 0, 0
    %p57 = scmp.lt.s32.totalorder %s56, 0
    %s58 = scalar_select %p57, %s56, 0
    %s59 = smul.u32 2, %s58
    %p60 = scmp.eq.s32.totalorder 0, 0
    // Predicated region
    $region18: #{tpu_custom_call.1} parent=1 // pred_check
      %p61 = pneg %p60
    $region19: #{tpu_custom_call.1} parent=1 // pred_check_branch
      %63 = sbr.rel (%p61) target = $region21
    $region20: #{tpu_custom_call.1} parent=1 // pred_region
      %64 = vst [vmem:[#allocation7] sm:$0xff] 0.0
    $region21: #{tpu_custom_call.1} parent=1 // pred_fallthru
      _
    %v65 = vld [vmem:[#allocation2] sm:$0xff]
    %v66 = vld [vmem:[#allocation2 + $0x8] sm:$0xff]
    %v67 = vld [vmem:[#allocation5] sm:$0xff]
    %v68 = vld [vmem:[#allocation5 + $0x8] sm:$0xff]
    %v69 = vmax.f32 %v65, 0.0
    %v70 = vmax.f32 %v66, 0.0
    %v71 = vmul.f32 %v65, %v67
    %v72 = vmul.f32 %v66, %v68
    %v73 = vsub.f32 %v69, %v71
    %v74 = vsub.f32 %v70, %v72
    %v75 = vand.u32 2147483647, %v65
    %v76 = vand.u32 2147483647, %v66
    %v77 = vsub.f32 0.0, %v75
    %v78 = vsub.f32 0.0, %v76
    %v79 = vmul.f32 %v77, 1.442695
    %v80 = vpow.pop %v79
    %v81 = vmul.f32 %v78, 1.442695
    %v82 = vpow.pop %v81
    %v83 = vadd.f32 %v80, 1.0
    %v84 = vlog2.pop %v83
    %v85 = vmul.f32 %v84, 0.6931472
    %v86 = vmul.f32 -0.5, %v80
    %v87 = vadd.f32 %v86, 1.0
    %v88 = vmul.f32 %v87, %v80
    %v89 = vand.u32 2147483647, %v80
    %vm90 = vcmp.lt.f32.partialorder %v89, 0.0004427343
    %v91 = vsel %vm90, %v88, %v85
    %v92 = vadd.f32 %v82, 1.0
    %v93 = vlog2.pop %v92
    %v94 = vmul.f32 %v93, 0.6931472
    %v95 = vmul.f32 -0.5, %v82
    %v96 = vadd.f32 %v95, 1.0
    %v97 = vmul.f32 %v96, %v82
    %v98 = vand.u32 2147483647, %v82
    %vm99 = vcmp.lt.f32.partialorder %v98, 0.0004427343
    %v100 = vsel %vm99, %v97, %v94
    %v101 = vadd.f32 %v73, %v91
    %v102 = vadd.f32 %v74, %v100
    %s103 = sadd.s32 0, 0
    %p104 = scmp.lt.s32.totalorder %s103, 1
    // Predicated region
    $region22: #{tpu_custom_call.1} parent=1 // pred_check
      %p105 = pneg %p104
    $region23: #{tpu_custom_call.1} parent=1 // pred_check_branch
      %107 = sbr.rel (%p105) target = $region25
    $region24: #{tpu_custom_call.1} parent=1 // pred_region
      %v108 = vld [vmem:[#allocation7] sm:$0xff]
      %v109 = vadd.f32 %v101, %v102
      %v110 = vadd.f32 %v108, %v109
      %111 = vst [vmem:[#allocation7] sm:$0xff] %v110
    $region25: #{tpu_custom_call.1} parent=1 // pred_fallthru
      _
    %p112 = scmp.ge.s32.totalorder %s103, 1
    // Predicated region
    $region26: #{tpu_custom_call.1} parent=1 // pred_check
      %p113 = pneg %p112
    $region27: #{tpu_custom_call.1} parent=1 // pred_check_branch
      %115 = sbr.rel (%p113) target = $region29
    $region28: #{tpu_custom_call.1} parent=1 // pred_region
      %v116 = vlaneseq
      %v117 = vshrl.u32 %v116, 7
      %v118 = vadd.s32 %v117, 8
      %v119 = vlaneseq
      %v120 = vand.u32 %v119, 127
      %s121 = smul.u32 %s103, 16
      %v122 = vstv %s121
      %v123 = vadd.s32 %v122, %v117
      %v124 = vadd.s32 %v122, %v118
      %v125 = vmul.u32 %v123, 128
      %v126 = vmul.u32 %v124, 128
      %v127 = vadd.s32 %v125, %v120
      %v128 = vadd.s32 %v126, %v120
      %vm129 = vcmp.lt.s32.totalorder %v127, 2048
      %vm130 = vcmp.lt.s32.totalorder %v128, 2048
      %v131 = vsel %vm129, %v101, 0.0
      %v132 = vsel %vm130, %v102, 0.0
      %v133 = vld [vmem:[#allocation7] sm:$0xff]
      %v134 = vadd.f32 %v131, %v132
      %v135 = vadd.f32 %v133, %v134
      %136 = vst [vmem:[#allocation7] sm:$0xff] %v135
    $region29: #{tpu_custom_call.1} parent=1 // pred_fallthru
      _
    // Predicated region
    $region30: #{tpu_custom_call.1} parent=1 // pred_check
      _
    $region31: #{tpu_custom_call.1} parent=1 // pred_check_branch
      %138 = sbr.rel (0) target = $region33
    $region32: #{tpu_custom_call.1} parent=1 // pred_region
      %s140 = ssub.s32 128, 128
      %141 = vsyncadd [#allocation4], %s140
      %s143 = sshll.u32 [#allocation7], 4
      %s144 = int_to_ptr.vmem [resolvable:$true] %s143
      %146 = dma.vmem_to_hbm [thread:$0]  %s144, 128, %s2, [#allocation4]
    $region33: #{tpu_custom_call.1} parent=1 // pred_fallthru
      _
    // Predicated region
    $region34: #{tpu_custom_call.1} parent=1 // pred_check
      _
    $region35: #{tpu_custom_call.1} parent=1 // pred_check_branch
      %148 = sbr.rel (0) target = $region37
    $region36: #{tpu_custom_call.1} parent=1 // pred_region
      %149 = dma.done [#allocation4], 128
    $region37: #{tpu_custom_call.1} parent=1 // pred_fallthru
      _
    %150 = vsyncpa [#allocation3], 1
    %151 = vsyncpa [#allocation6], 1
    %152 = vsyncpa [#allocation4], 1

</llo_original>
